<compile_context>
chip_gen: v7x
topology: tpu7x:2x2x1
jax: 0.10.0
libtpu: 0.0.40
codegen_flags: <defaults>
</compile_context>

<pallas_src>
import jax
import jax.numpy as jnp
from jax.experimental import pallas as pl
from jax.experimental.pallas import tpu as pltpu

_LANE = 128


def _round_up(x, m):
    return (x + m - 1) // m * m


def _round_down(x, m):
    return (x // m) * m


def _sublane(itemsize):
    # rows per native sublane tile: f32 -> 8, bf16 -> 16, int8/fp8 -> 32
    return max(8, 32 // itemsize)


def _discriminator_kernel(x_ref, w_ref, b_ref, o_ref):
    # x_ref: (tb, L) VMEM (stream dtype)    w_ref: (1, L) VMEM, resident
    # b_ref: (1,) SMEM                      o_ref: (tb, 1) VMEM
    #
    # N=1 mat-vec: VPU broadcast-multiply in the *stream* dtype (no full-tile
    # f32 copy of x or w is materialized), then an XLU cross-lane row reduce
    # accumulated in f32.  The MXU is skipped on purpose (only 1 of 256 output
    # columns would be useful).
    prod = x_ref[...] * w_ref[...]                                     # (tb, L)
    logits = jnp.sum(prod, axis=-1, keepdims=True, dtype=jnp.float32) + b_ref[0]

    # Exact sigmoid: exp runs on the EUP; the divide only touches (tb, 1).
    # NOTE: rows of the final partial batch tile may hold stale VMEM data; all
    # ops here are strictly row-local and those rows are clipped on writeback,
    # so inf/nan in dead rows cannot leak into valid outputs.
    o_ref[...] = (1.0 / (1.0 + jnp.exp(-logits))).astype(o_ref.dtype)


def _pick_batch_tile(batch, length, itemsize):
    """Rows of x processed per grid step.

    Budgeted in VMEM bytes: both the (tb, L) x block and the (tb, 1) output
    block pad their lane dim to 128 inside VMEM, so for small L the padded
    footprint -- not L*itemsize -- is the real limit.  Targets ~12 MiB per x
    buffer at large L while keeping the double-buffered total comfortably
    under v7x's 64 MiB physical VMEM (v5e/v6e have 128 MiB).
    """
    sublane = _sublane(itemsize)
    if batch <= sublane:
        return batch                                  # one full-array block (always legal)

    lane_pad = _round_up(length, _LANE)
    # double-buffered x block + double-buffered (tb, 1) output block, lane-padded
    per_row_vmem = 2 * lane_pad * itemsize + 2 * _LANE * itemsize
    vmem_target = 24 * 1024 * 1024
    tb = max(sublane, vmem_target // per_row_vmem)

    # v7x has 2 TensorCores: keep >= ~8 grid steps (>= 4 per core) so the
    # "parallel" batch axis shards and still pipelines -- but only when each
    # step still streams >= ~1 MiB of x from HBM (otherwise fewer, larger
    # steps win against the ~0.35 us per-step overhead).
    steps_cap = _round_up(pl.cdiv(batch, 8), sublane)
    min_rows = max(sublane, (1 * 1024 * 1024) // max(1, length * itemsize))
    if steps_cap >= min_rows:
        tb = min(tb, steps_cap)

    tb = min(tb, _round_down(batch, sublane))         # never exceed the array
    return max(sublane, _round_down(tb, sublane))


def discriminator_forward(x, weight, bias):
    """sigmoid(x @ weight.T + bias) — forward pass of the Discriminator."""
    B, L = x.shape
    assert weight.shape == (1, L), weight.shape
    assert bias.shape == (1,), bias.shape

    itemsize = jnp.dtype(x.dtype).itemsize
    sublane = _sublane(itemsize)
    lane_pad = _round_up(L, _LANE)

    # Whole feature dim must fit a double-buffered VMEM block.
    # TODO(synk): add a K-reduction grid axis with an f32 VMEM accumulator for
    # input_length beyond ~3M f32 features (unrealistic for this module).
    if 2 * sublane * lane_pad * itemsize > 48 * 1024 * 1024:
        raise NotImplementedError("input_length too large for a single-block reduction")

    # Cast the (1, L) weight to the stream dtype once here, instead of
    # re-casting it inside every (sequential) grid step.
    weight = weight.astype(x.dtype)

    tb = _pick_batch_tile(B, L, itemsize)
    grid = (pl.cdiv(B, tb),)   # no jnp.pad: partial tail block is clipped on writeback

    # Explicit scoped-VMEM limit (v5e default is only 16 MiB): 2 x-buffers +
    # 2 out-buffers (both lane-padded) + resident weight + f32 reduce column
    # + slack, clamped under v7x's 64 MiB physical ceiling.
    x_blk = tb * lane_pad * itemsize
    o_blk = tb * _LANE * itemsize
    col_f32 = tb * _LANE * 4
    w_blk = sublane * lane_pad * itemsize
    est = 2 * x_blk + 2 * o_blk + col_f32 + w_blk + (4 << 20)
    vmem_limit = int(min(60 << 20, max(32 << 20, est)))

    out = pl.pallas_call(
        _discriminator_kernel,
        out_shape=jax.ShapeDtypeStruct((B, 1), x.dtype),
        grid_spec=pltpu.PrefetchScalarGridSpec(
            num_scalar_prefetch=0,
            grid=grid,
            in_specs=[
                pl.BlockSpec((tb, L), lambda i: (i, 0)),            # x: pipelined batch tiles
                pl.BlockSpec((1, L), lambda i: (0, 0)),             # weight: constant -> resident
                pl.BlockSpec(memory_space=pltpu.MemorySpace.SMEM),  # bias scalar in SMEM
            ],
            # (tb, 1) column output; its lane-padded VMEM cost is charged to the
            # tile budget above (see header note on the lane-dense alternative).
            out_specs=pl.BlockSpec((tb, 1), lambda i: (i, 0)),
            # pipeline_mode=pl.Buffered(3) on the x spec is worth a sweep on
            # latency-sensitive shapes; default double-buffering is kept here.
        ),
        compiler_params=pltpu.CompilerParams(
            dimension_semantics=("parallel",),   # batch tiles shard across v7x's 2 TCs
            vmem_limit_bytes=vmem_limit,
        ),
    )(x, weight, bias)
    return out


def init_discriminator_params(key, input_length):
    """torch.nn.Linear default init: U(-1/sqrt(L), 1/sqrt(L)); PyTorch layout."""
    kw, kb = jax.random.split(key)
    bound = 1.0 / (input_length ** 0.5)
    weight = jax.random.uniform(kw, (1, input_length), jnp.float32, -bound, bound)
    bias = jax.random.uniform(kb, (1,), jnp.float32, -bound, bound)
    return weight, bias


if __name__ == "__main__":
    key = jax.random.PRNGKey(0)
    k_x, k_p, k_x2 = jax.random.split(key, 3)

    batch = 8
    input_length = 32

    x = jax.random.normal(k_x, (batch, input_length), jnp.float32)
    weight, bias = init_discriminator_params(k_p, input_length)

    out = jax.block_until_ready(discriminator_forward(x, weight, bias))
    ref = jax.nn.sigmoid(x @ weight.T + bias)
    assert out.shape == (batch, 1)
    assert jnp.allclose(out, ref, atol=1e-5), "mismatch vs reference"

    # Exercise the un-padded partial tail block (B not a multiple of the tile).
    x2 = jax.random.normal(k_x2, (20, input_length), jnp.float32)
    out2 = jax.block_until_ready(discriminator_forward(x2, weight, bias))
    ref2 = jax.nn.sigmoid(x2 @ weight.T + bias)
    assert out2.shape == (20, 1)
    assert jnp.allclose(out2, ref2, atol=1e-5), "tail-block mismatch vs reference"

    print("KERNEL_OK")
</pallas_src>

<mosaic_0001>
module attributes {stable_mosaic.version = 11 : i64} {
  func.func @_discriminator_kernel(%arg0: i32, %arg1: memref<8x32xf32, #tpu.memory_space<vmem>>, %arg2: memref<1x32xf32, #tpu.memory_space<vmem>>, %arg3: memref<1xf32, #tpu.memory_space<smem>>, %arg4: memref<8x1xf32, #tpu.memory_space<vmem>>) attributes {dimension_semantics = [#tpu.dimension_semantics<parallel>], iteration_bounds = array<i64: 1>, scalar_prefetch = 0 : i64, scratch_operands = 0 : i64, tpu.core_type = #tpu.core_type<tc>, window_params = [{transform_indices = @transform_0, window_bounds = array<i64: 8, 32>}, {pipeline_mode = #tpu.pipeline_mode<synchronous>, transform_indices = @transform_1, window_bounds = array<i64: 1, 32>}, {transform_indices = @transform_2, window_bounds = array<i64: 1>}, {transform_indices = @transform_3, window_bounds = array<i64: 8, 1>}]} {
    %c0 = arith.constant 0 : index
    %c0_0 = arith.constant 0 : index
    %0 = vector.load %arg1[%c0, %c0_0] : memref<8x32xf32, #tpu.memory_space<vmem>>, vector<8x32xf32>
    %c0_1 = arith.constant 0 : index
    %c0_2 = arith.constant 0 : index
    %1 = vector.load %arg2[%c0_1, %c0_2] : memref<1x32xf32, #tpu.memory_space<vmem>>, vector<1x32xf32>
    %2 = vector.broadcast %1 : vector<1x32xf32> to vector<8x32xf32>
    %3 = arith.mulf %0, %2 : vector<8x32xf32>
    %cst = arith.constant dense<0.000000e+00> : vector<8xf32>
    %4 = vector.multi_reduction <add>, %3, %cst [1] : vector<8x32xf32> to vector<8xf32>
    %5 = vector.shape_cast %4 : vector<8xf32> to vector<8x1xf32>
    %c0_3 = arith.constant 0 : index
    %6 = memref.load %arg3[%c0_3] : memref<1xf32, #tpu.memory_space<smem>>
    %7 = vector.broadcast %6 : f32 to vector<8x1xf32>
    %8 = arith.addf %5, %7 : vector<8x1xf32>
    %cst_4 = arith.constant 0.000000e+00 : f32
    %9 = vector.broadcast %cst_4 : f32 to vector<8x1xf32>
    %10 = arith.subf %9, %8 : vector<8x1xf32>
    %11 = math.exp %10 : vector<8x1xf32>
    %cst_5 = arith.constant 1.000000e+00 : f32
    %12 = vector.broadcast %cst_5 : f32 to vector<8x1xf32>
    %13 = arith.addf %12, %11 : vector<8x1xf32>
    %cst_6 = arith.constant 1.000000e+00 : f32
    %14 = vector.broadcast %cst_6 : f32 to vector<8x1xf32>
    %15 = arith.divf %14, %13 : vector<8x1xf32>
    %c0_7 = arith.constant 0 : index
    %c0_8 = arith.constant 0 : index
    %16 = vector.load %arg4[%c0_7, %c0_8] : memref<8x1xf32, #tpu.memory_space<vmem>>, vector<8x1xf32>
    tpu.vector_store %arg4[%c0_7, %c0_8], %15 {strides = array<i32>} : memref<8x1xf32, #tpu.memory_space<vmem>>, vector<8x1xf32>,
    return
  }
  func.func @transform_0(%arg0: i32) -> (i32, i32) {
    %c0_i32 = arith.constant 0 : i32
    %c0_i32_0 = arith.constant 0 : i32
    return %arg0, %c0_i32 : i32, i32
  }
  func.func @transform_1(%arg0: i32) -> (i32, i32) {
    %c0_i32 = arith.constant 0 : i32
    %c0_i32_0 = arith.constant 0 : i32
    %c0_i32_1 = arith.constant 0 : i32
    return %c0_i32, %c0_i32_0 : i32, i32
  }
  func.func @transform_2(%arg0: i32) -> i32 {
    %c0_i32 = arith.constant 0 : i32
    %c0_i32_0 = arith.constant 0 : i32
    return %c0_i32 : i32
  }
  func.func @transform_3(%arg0: i32) -> (i32, i32) {
    %c0_i32 = arith.constant 0 : i32
    %c0_i32_0 = arith.constant 0 : i32
    return %arg0, %c0_i32 : i32, i32
  }
}

</mosaic_0001>

<llo_original>
// kernel: tpu_custom_call.1
$region0: #{tpu_custom_call.1}
  #allocation0 [shape = 'u32[]', space=smem, size = 0x4, offset = 0x4, fixed_abs, tag = 'smem constant byte address 0x4 - core index']
  #allocation1 [shape = 'u32[144,128]{1,0:T(1,128)}', space=vmem, size = 0x12000, scoped, tag = 'internal scratch']
  #allocation2 [shape = 'f32[1]{0:T(128)S(6)}', space=smem, size = 0x200, scoped, tag = 'scoped memory for tpu_custom_call.1']
  %s0 = inlined_call_operand.hbm [shape: f32[8,32], index: 0, kind: input, shape index: {}]
  %s1 = inlined_call_operand.vmem [shape: f32[1,32], index: 1, kind: input, shape index: {}]
  %s2 = inlined_call_operand.<no memory space> [shape: f32[1], index: 2, kind: input, shape index: {}]
  %s3 = inlined_call_operand.vmem [shape: f32[8,1], index: 3, kind: output, shape index: {}]
  %s4 = sld [smem:[#allocation0]]
  $region26: #{tpu_custom_call.1} parent=0
    _
  %s6 = ssub.s32 1, %s4
  %s7 = scalar_select 0, %s6, %s4
  %8 = sst [smem:[#allocation2]] %s2
  $region1: #{tpu_custom_call.1} parent=0
    #allocation3 [shape = 'u8[4096]{0}', space=vmem, size = 0x1000, scoped, tag = 'input window, operand 0, single buffered']
    #allocation4 [shape = 's32[1]{0}', space=sflag, size = 0x4, scoped, tag = 'scoped memory for tpu_custom_call.1']
    %9 = vsyncpa [#allocation4], 0
    // Predicated region
    $region2: #{tpu_custom_call.1} parent=1 // pred_check
      _
    $region3: #{tpu_custom_call.1} parent=1 // pred_check_branch
      %11 = sbr.rel (0) target = $region5
    $region4: #{tpu_custom_call.1} parent=1 // pred_region
      %s13 = ssub.s32 128, 128
      %14 = vsyncadd [#allocation4], %s13
      %s16 = sshll.u32 [#allocation3], 4
      %s17 = int_to_ptr.vmem [resolvable:$true] %s16
      %19 = dma.hbm_to_vmem [thread:$0]  %s0, 128, %s17, [#allocation4]
    $region5: #{tpu_custom_call.1} parent=1 // pred_fallthru
      _
    // Predicated region
    $region6: #{tpu_custom_call.1} parent=1 // pred_check
      _
    $region7: #{tpu_custom_call.1} parent=1 // pred_check_branch
      %21 = sbr.rel (0) target = $region9
    $region8: #{tpu_custom_call.1} parent=1 // pred_region
      _
    $region9: #{tpu_custom_call.1} parent=1 // pred_fallthru
      _
    // Predicated region
    $region10: #{tpu_custom_call.1} parent=1 // pred_check
      _
    $region11: #{tpu_custom_call.1} parent=1 // pred_check_branch
      %23 = sbr.rel (0) target = $region13
    $region12: #{tpu_custom_call.1} parent=1 // pred_region
      _
    $region13: #{tpu_custom_call.1} parent=1 // pred_fallthru
      _
    // Predicated region
    $region14: #{tpu_custom_call.1} parent=1 // pred_check
      _
    $region15: #{tpu_custom_call.1} parent=1 // pred_check_branch
      %25 = sbr.rel (0) target = $region17
    $region16: #{tpu_custom_call.1} parent=1 // pred_region
      %26 = dma.done [#allocation4], 128
    $region17: #{tpu_custom_call.1} parent=1 // pred_fallthru
      _
    %v27 = vld [vmem:[#allocation3] sm:$0xff]
    %v28 = vld [vmem:[%s1] sm:$0x1]
    %v30 = vlaneseq
    %v31 = vshrl.u32 %v30, 7
    %v32 = vsub.s32 0, %v31
    %v33 = vrot.slane %v28, %v32
    %v35 = vmul.f32 %v27, %v33
    %vm36 = vcmask 261120
    %v37 = vsel %vm36, %v35, 0.0
    %38 = vadd.xlane.f32.xlu0 %v37
    %v39 = vpop.xlane.xlu0 %38
    %s40 = sld [smem:[#allocation2]]
    %v41 = vstv %s40
    %v42 = vadd.f32 %v39, %v41
    %v43 = vsub.f32 0.0, %v42
    %v44 = vmul.f32 %v43, 1.442695
    %v45 = vpow.pop %v44
    %v46 = vadd.f32 %v45, 1.0
    %v47 = vrcp.pop %v46
    %v48 = vmul.f32 1.0, %v47
    %vm49 = vcmask 7168
    %50 = vst.msk [vmem:[%s3] sm:$0xff] %vm49, %v48
    // Predicated region
    $region18: #{tpu_custom_call.1} parent=1 // pred_check
      _
    $region19: #{tpu_custom_call.1} parent=1 // pred_check_branch
      %52 = sbr.rel (0) target = $region21
    $region20: #{tpu_custom_call.1} parent=1 // pred_region
      _
    $region21: #{tpu_custom_call.1} parent=1 // pred_fallthru
      _
    // Predicated region
    $region22: #{tpu_custom_call.1} parent=1 // pred_check
      _
    $region23: #{tpu_custom_call.1} parent=1 // pred_check_branch
      %54 = sbr.rel (0) target = $region25
    $region24: #{tpu_custom_call.1} parent=1 // pred_region
      _
    $region25: #{tpu_custom_call.1} parent=1 // pred_fallthru
      _
    %55 = vsyncpa [#allocation4], 1

</llo_original>
